<compile_context>
chip_gen: v7x
topology: tpu7x:2x2x1
jax: 0.10.0
libtpu: 0.0.40
codegen_flags: <defaults>
</compile_context>

<pallas_src>
import functools

import jax
import jax.numpy as jnp
from jax.experimental import pallas as pl
from jax.experimental.pallas import tpu as pltpu

_TARGET_STEPS = 8             # aim for >= this many grid steps (pipelining / v7x 2 TCs)
_MIN_BLOCK_BYTES = 512 << 10  # never shrink a block below this just to add steps


def _default_block_budget_bytes():
    """Per-generation payload target per block (in+out double-buffered ~= 4x this)."""
    try:
        kind = jax.devices()[0].device_kind.lower()
    except Exception:
        kind = ""
    if "v7" in kind or "tpu7" in kind:
        return 6 << 20   # v7x: ~3.2 TB/s HBM -> fat blocks; stays well under 64 MiB VMEM
    if "v6" in kind or "trillium" in kind:
        return 4 << 20   # v6e: copy roofline ~85% around 1-4 MiB tiles
    if "v5 lite" in kind or "v5e" in kind:
        return 2 << 20   # v5e: stay near the 16 MiB scoped-VMEM default
    return 2 << 20       # unknown / older: conservative


def _vmem_limit_bytes(block_bytes):
    """in + out, double-buffered, + headroom; only override when the default won't fit."""
    need = 4 * block_bytes + (1 << 20)
    if need <= (16 << 20):
        return None                       # fits the smallest scoped default (v5e)
    return int(min(need, 48 << 20))       # stay well under v7x's 64 MiB physical VMEM


# ---------------------------------------------------------------------------
# Kernel bodies.
# ---------------------------------------------------------------------------
def _roll_kernel_flat(x_ref, o_ref, *, shift):
    # (bb, L*C) block: one XLU lane rotate -> dense load, dense store; the rotation
    # runs in the vector-extended slot, off the load/store critical path.
    o_ref[...] = pltpu.roll(x_ref[...], shift, 1)


def _copy_kernel_flat(x_ref, o_ref, *, shift):
    # Fallback body: two static slice copies along the flattened lane axis.
    n = x_ref.shape[1]
    o_ref[:, shift:] = x_ref[:, : n - shift]
    o_ref[:, :shift] = x_ref[:, n - shift :]


def _copy_kernel_seq(x_ref, o_ref, *, shift):
    # (1, L, tc) block: roll along the sequence (sublane) axis with slice copies.
    l = x_ref.shape[1]
    o_ref[:, shift:, :] = x_ref[:, : l - shift, :]
    o_ref[:, :shift, :] = x_ref[:, l - shift :, :]


# ---------------------------------------------------------------------------
# Drivers.
# ---------------------------------------------------------------------------
def _shift_flat(x, d, budget):
    """Roll along L by d via a lane-axis roll of the flattened (B, L*C) view."""
    B, L, C = x.shape
    itemsize = jnp.dtype(x.dtype).itemsize
    n = L * C
    s = d * C                      # roll by d rows of L == roll by d*C flattened elems
    row_bytes = n * itemsize

    rows_budget = max(1, budget // row_bytes)
    rows_floor = max(1, _MIN_BLOCK_BYTES // row_bytes)
    rows_steps = pl.cdiv(B, _TARGET_STEPS)
    bb = max(1, min(B, rows_budget, max(rows_steps, rows_floor)))
    if bb >= 8:                    # sublane-friendly row count when we can afford it
        bb = (bb // 8) * 8
    grid = (pl.cdiv(B, bb),)
    block_bytes = bb * row_bytes

    x_flat = x.reshape(B, n)       # contiguous merge of (L, C): free reshape
    use_roll = (itemsize == 4) and (n % 128 == 0)

    def run(body):
        return pl.pallas_call(
            functools.partial(body, shift=s),
            out_shape=jax.ShapeDtypeStruct((B, n), x.dtype),
            grid_spec=pl.GridSpec(
                grid=grid,
                in_specs=[pl.BlockSpec((bb, n), lambda i: (i, 0))],
                out_specs=pl.BlockSpec((bb, n), lambda i: (i, 0)),
            ),
            compiler_params=pltpu.CompilerParams(
                dimension_semantics=("parallel",),
                vmem_limit_bytes=_vmem_limit_bytes(block_bytes),
            ),
            cost_estimate=pl.CostEstimate(
                flops=0, transcendentals=0, bytes_accessed=2 * B * n * itemsize),
        )(x_flat)

    if use_roll:
        try:
            return run(_roll_kernel_flat).reshape(B, L, C)
        except Exception:
            # Conservative guard: if Mosaic rejects the rotate for this shape/dtype,
            # the two-slice copy body below always lowers.
            pass
    return run(_copy_kernel_flat).reshape(B, L, C)


def _shift_channel_tiled(x, d, budget):
    """Rows larger than the block budget: roll along L (sublanes), tile C (lanes)."""
    B, L, C = x.shape
    itemsize = jnp.dtype(x.dtype).itemsize
    tc = (budget // (L * itemsize)) // 128 * 128
    tc = max(128, tc)
    if tc >= C:
        tc = C                       # full-dim block always satisfies the lane rule
    grid = (B, pl.cdiv(C, tc))
    block_bytes = L * tc * itemsize
    return pl.pallas_call(
        functools.partial(_copy_kernel_seq, shift=d),
        out_shape=jax.ShapeDtypeStruct((B, L, C), x.dtype),
        grid_spec=pl.GridSpec(
            grid=grid,
            in_specs=[pl.BlockSpec((1, L, tc), lambda b, j: (b, 0, j))],
            out_specs=pl.BlockSpec((1, L, tc), lambda b, j: (b, 0, j)),
        ),
        compiler_params=pltpu.CompilerParams(
            dimension_semantics=("parallel", "parallel"),
            vmem_limit_bytes=_vmem_limit_bytes(block_bytes),
        ),
        cost_estimate=pl.CostEstimate(
            flops=0, transcendentals=0, bytes_accessed=2 * B * L * C * itemsize),
    )(x)


def cyclic_shift(x, displacement, *, block_budget_bytes=None):
    """Pallas implementation of CyclicShift.forward: torch.roll(x, displacement, dims=1).

    Args:
      x: jnp.ndarray of shape (B, L, C).
      displacement: python int (may be negative), roll amount along L.
      block_budget_bytes: optional per-block payload override (testing / tuning).
    """
    B, L, C = x.shape
    d = int(displacement) % L
    if d == 0:
        return x                     # no-op roll: skip the kernel and the HBM round trip

    budget = int(block_budget_bytes) if block_budget_bytes else _default_block_budget_bytes()
    itemsize = jnp.dtype(x.dtype).itemsize
    row_bytes = L * C * itemsize
    if row_bytes > budget and C >= 128:
        return _shift_channel_tiled(x, d, budget)
    # TODO(synk): rows with C < 128 whose L*C payload exceeds ~10 MiB would need a
    # wrap-aware L-axis tiling; not needed for Swin-style shapes.
    return _shift_flat(x, d, budget)


class CyclicShift:
    """Thin module-style wrapper mirroring the PyTorch CyclicShift."""

    def __init__(self, displacement):
        self.displacement = displacement

    def __call__(self, x):
        return cyclic_shift(x, self.displacement)


if __name__ == "__main__":
    k0, k1, k2 = jax.random.split(jax.random.PRNGKey(0), 3)

    # Main case: lane-dense flattened path (L*C % 128 == 0 -> pltpu.roll body).
    B, L, C = 8, 8, 32
    displacement = 3
    x = jax.random.normal(k0, (B, L, C), dtype=jnp.float32)
    out = jax.block_until_ready(cyclic_shift(x, displacement))
    ref = jnp.roll(x, shift=displacement, axis=1)
    assert out.shape == ref.shape and out.dtype == ref.dtype
    assert jnp.array_equal(out, ref), "mismatch vs reference roll (+3)"

    # Negative displacement.
    out_neg = jax.block_until_ready(cyclic_shift(x, -2))
    assert jnp.array_equal(out_neg, jnp.roll(x, shift=-2, axis=1)), "mismatch (-2)"

    # d % L == 0 fast path (no kernel launch).
    assert cyclic_shift(x, L) is x, "no-op fast path not taken"

    # Flattened slice-copy body (L*C not a multiple of 128) + ragged cdiv batch grid.
    x2 = jax.random.normal(k1, (5, 6, 20), dtype=jnp.float32)
    out2 = jax.block_until_ready(
        cyclic_shift(x2, 4, block_budget_bytes=2 * 6 * 20 * 4))
    assert jnp.array_equal(out2, jnp.roll(x2, 4, axis=1)), "mismatch (ragged flat path)"

    # Channel-tiled 3-D fallback path (row exceeds block budget, C >= 128).
    x3 = jax.random.normal(k2, (2, 16, 256), dtype=jnp.float32)
    out3 = jax.block_until_ready(cyclic_shift(x3, 5, block_budget_bytes=8 * 1024))
    assert jnp.array_equal(out3, jnp.roll(x3, 5, axis=1)), "mismatch (channel-tiled path)"

    print("KERNEL_OK")
</pallas_src>

<mosaic_0001>
module attributes {stable_mosaic.version = 11 : i64} {
  func.func @_roll_kernel_flat(%arg0: i32, %arg1: memref<8x256xf32, #tpu.memory_space<vmem>>, %arg2: memref<8x256xf32, #tpu.memory_space<vmem>>) attributes {dimension_semantics = [#tpu.dimension_semantics<parallel>], iteration_bounds = array<i64: 1>, scalar_prefetch = 0 : i64, scratch_operands = 0 : i64, tpu.core_type = #tpu.core_type<tc>, window_params = [{transform_indices = @transform_0, window_bounds = array<i64: 8, 256>}, {transform_indices = @transform_1, window_bounds = array<i64: 8, 256>}]} {
    %c0 = arith.constant 0 : index
    %c0_0 = arith.constant 0 : index
    %0 = vector.load %arg1[%c0, %c0_0] : memref<8x256xf32, #tpu.memory_space<vmem>>, vector<8x256xf32>
    %c96_i32 = arith.constant 96 : i32
    %1 = tpu.dynamic_rotate %0 by %c96_i32 dim 1 : vector<8x256xf32>, i32 -> vector<8x256xf32>
    %c0_1 = arith.constant 0 : index
    %c0_2 = arith.constant 0 : index
    %2 = vector.load %arg2[%c0_1, %c0_2] : memref<8x256xf32, #tpu.memory_space<vmem>>, vector<8x256xf32>
    tpu.vector_store %arg2[%c0_1, %c0_2], %1 {strides = array<i32>} : memref<8x256xf32, #tpu.memory_space<vmem>>, vector<8x256xf32>,
    return
  }
  func.func @transform_0(%arg0: i32) -> (i32, i32) {
    %c0_i32 = arith.constant 0 : i32
    %c0_i32_0 = arith.constant 0 : i32
    return %arg0, %c0_i32 : i32, i32
  }
  func.func @transform_1(%arg0: i32) -> (i32, i32) {
    %c0_i32 = arith.constant 0 : i32
    %c0_i32_0 = arith.constant 0 : i32
    return %arg0, %c0_i32 : i32, i32
  }
}

module attributes {stable_mosaic.version = 11 : i64} {
  func.func @_copy_kernel_flat(%arg0: i32, %arg1: memref<8x256xf32, #tpu.memory_space<vmem>>, %arg2: memref<8x256xf32, #tpu.memory_space<vmem>>) attributes {dimension_semantics = [#tpu.dimension_semantics<parallel>], iteration_bounds = array<i64: 1>, scalar_prefetch = 0 : i64, scratch_operands = 0 : i64, tpu.core_type = #tpu.core_type<tc>, window_params = [{transform_indices = @transform_0, window_bounds = array<i64: 8, 256>}, {transform_indices = @transform_1, window_bounds = array<i64: 8, 256>}]} {
    %c0 = arith.constant 0 : index
    %c0_0 = arith.constant 0 : index
    %0 = vector.load %arg1[%c0, %c0_0] : memref<8x256xf32, #tpu.memory_space<vmem>>, vector<8x160xf32>
    %c0_1 = arith.constant 0 : index
    %c96 = arith.constant 96 : index
    %1 = vector.load %arg2[%c0_1, %c96] : memref<8x256xf32, #tpu.memory_space<vmem>>, vector<8x160xf32>
    tpu.vector_store %arg2[%c0_1, %c96], %0 {strides = array<i32>} : memref<8x256xf32, #tpu.memory_space<vmem>>, vector<8x160xf32>,
    %c0_2 = arith.constant 0 : index
    %c160 = arith.constant 160 : index
    %2 = vector.load %arg1[%c0_2, %c160] : memref<8x256xf32, #tpu.memory_space<vmem>>, vector<8x96xf32>
    %c0_3 = arith.constant 0 : index
    %c0_4 = arith.constant 0 : index
    %3 = vector.load %arg2[%c0_3, %c0_4] : memref<8x256xf32, #tpu.memory_space<vmem>>, vector<8x96xf32>
    tpu.vector_store %arg2[%c0_3, %c0_4], %2 {strides = array<i32>} : memref<8x256xf32, #tpu.memory_space<vmem>>, vector<8x96xf32>,
    return
  }
  func.func @transform_0(%arg0: i32) -> (i32, i32) {
    %c0_i32 = arith.constant 0 : i32
    %c0_i32_0 = arith.constant 0 : i32
    return %arg0, %c0_i32 : i32, i32
  }
  func.func @transform_1(%arg0: i32) -> (i32, i32) {
    %c0_i32 = arith.constant 0 : i32
    %c0_i32_0 = arith.constant 0 : i32
    return %arg0, %c0_i32 : i32, i32
  }
}

</mosaic_0001>

<llo_original>
// kernel: tpu_custom_call.1
$region0: #{tpu_custom_call.1}
  #allocation0 [shape = 'u32[]', space=smem, size = 0x4, offset = 0x4, fixed_abs, tag = 'smem constant byte address 0x4 - core index']
  #allocation1 [shape = 'u32[144,128]{1,0:T(1,128)}', space=vmem, size = 0x12000, scoped, tag = 'internal scratch']
  %s0 = inlined_call_operand.hbm [shape: f32[8,256], index: 0, kind: input, shape index: {}]
  %s1 = inlined_call_operand.hbm [shape: f32[8,256], index: 1, kind: output, shape index: {}]
  %s2 = sld [smem:[#allocation0]]
  $region18: #{tpu_custom_call.1} parent=0
    _
  %s4 = ssub.s32 1, %s2
  %s5 = scalar_select 0, %s4, %s2
  $region1: #{tpu_custom_call.1} parent=0
    #allocation2 [shape = 'u8[8192]{0}', space=vmem, size = 0x2000, scoped, tag = 'input window, operand 0, single buffered']
    #allocation3 [shape = 's32[1]{0}', space=sflag, size = 0x4, scoped, tag = 'scoped memory for tpu_custom_call.1']
    #allocation4 [shape = 's32[1]{0}', space=sflag, size = 0x4, scoped, tag = 'scoped memory for tpu_custom_call.1']
    #allocation5 [shape = 'u8[8192]{0}', space=vmem, size = 0x2000, scoped, tag = 'output window, operand 0, single buffered']
    %6 = vsyncpa [#allocation3], 0
    %7 = vsyncpa [#allocation4], 0
    // Predicated region
    $region2: #{tpu_custom_call.1} parent=1 // pred_check
      _
    $region3: #{tpu_custom_call.1} parent=1 // pred_check_branch
      %9 = sbr.rel (0) target = $region5
    $region4: #{tpu_custom_call.1} parent=1 // pred_region
      %s11 = ssub.s32 256, 256
      %12 = vsyncadd [#allocation3], %s11
      %s14 = sshll.u32 [#allocation2], 4
      %s15 = int_to_ptr.vmem [resolvable:$true] %s14
      %17 = dma.hbm_to_vmem [thread:$0]  %s0, 256, %s15, [#allocation3]
    $region5: #{tpu_custom_call.1} parent=1 // pred_fallthru
      _
    // Predicated region
    $region6: #{tpu_custom_call.1} parent=1 // pred_check
      _
    $region7: #{tpu_custom_call.1} parent=1 // pred_check_branch
      %19 = sbr.rel (0) target = $region9
    $region8: #{tpu_custom_call.1} parent=1 // pred_region
      %20 = dma.done [#allocation3], 256
    $region9: #{tpu_custom_call.1} parent=1 // pred_fallthru
      _
    %v21 = vld [vmem:[#allocation2] sm:$0xff]
    %v22 = vld [vmem:[#allocation2 + $0x8] sm:$0xff]
    %23 = vrot.lane.b32.xlu0 %v21, 96
    %v24 = vpop.permute.xlu0 %23
    %25 = vrot.lane.b32.xlu0 %v22, 96
    %v26 = vpop.permute.xlu0 %25
    %v27 = vlaneseq
    %v28 = vand.u32 %v27, 127
    %vm29 = vcmp.lt.s32.totalorder %v28, 96
    %v30 = vsel %vm29, %v24, %v26
    %v31 = vsel %vm29, %v26, %v24
    %32 = vst [vmem:[#allocation5] sm:$0xff] %v31
    %33 = vst [vmem:[#allocation5 + $0x8] sm:$0xff] %v30
    // Predicated region
    $region10: #{tpu_custom_call.1} parent=1 // pred_check
      _
    $region11: #{tpu_custom_call.1} parent=1 // pred_check_branch
      %35 = sbr.rel (0) target = $region13
    $region12: #{tpu_custom_call.1} parent=1 // pred_region
      %s37 = ssub.s32 256, 256
      %38 = vsyncadd [#allocation4], %s37
      %s40 = sshll.u32 [#allocation5], 4
      %s41 = int_to_ptr.vmem [resolvable:$true] %s40
      %43 = dma.vmem_to_hbm [thread:$0]  %s41, 256, %s1, [#allocation4]
    $region13: #{tpu_custom_call.1} parent=1 // pred_fallthru
      _
    // Predicated region
    $region14: #{tpu_custom_call.1} parent=1 // pred_check
      _
    $region15: #{tpu_custom_call.1} parent=1 // pred_check_branch
      %45 = sbr.rel (0) target = $region17
    $region16: #{tpu_custom_call.1} parent=1 // pred_region
      %46 = dma.done [#allocation4], 256
    $region17: #{tpu_custom_call.1} parent=1 // pred_fallthru
      _
    %47 = vsyncpa [#allocation3], 1
    %48 = vsyncpa [#allocation4], 1

// kernel: tpu_custom_call.1
$region0: #{tpu_custom_call.1}
  #allocation0 [shape = 'u32[]', space=smem, size = 0x4, offset = 0x4, fixed_abs, tag = 'smem constant byte address 0x4 - core index']
  #allocation1 [shape = 'u32[144,128]{1,0:T(1,128)}', space=vmem, size = 0x12000, scoped, tag = 'internal scratch']
  %s0 = inlined_call_operand.hbm [shape: f32[8,256], index: 0, kind: input, shape index: {}]
  %s1 = inlined_call_operand.hbm [shape: f32[8,256], index: 1, kind: output, shape index: {}]
  %s2 = sld [smem:[#allocation0]]
  $region18: #{tpu_custom_call.1} parent=0
    _
  %s4 = ssub.s32 1, %s2
  %s5 = scalar_select 0, %s4, %s2
  $region1: #{tpu_custom_call.1} parent=0
    #allocation2 [shape = 'u8[8192]{0}', space=vmem, size = 0x2000, scoped, tag = 'input window, operand 0, single buffered']
    #allocation3 [shape = 's32[1]{0}', space=sflag, size = 0x4, scoped, tag = 'scoped memory for tpu_custom_call.1']
    #allocation4 [shape = 's32[1]{0}', space=sflag, size = 0x4, scoped, tag = 'scoped memory for tpu_custom_call.1']
    #allocation5 [shape = 'u8[8192]{0}', space=vmem, size = 0x2000, scoped, tag = 'output window, operand 0, single buffered']
    %6 = vsyncpa [#allocation3], 0
    %7 = vsyncpa [#allocation4], 0
    // Predicated region
    $region2: #{tpu_custom_call.1} parent=1 // pred_check
      _
    $region3: #{tpu_custom_call.1} parent=1 // pred_check_branch
      %9 = sbr.rel (0) target = $region5
    $region4: #{tpu_custom_call.1} parent=1 // pred_region
      %s11 = ssub.s32 256, 256
      %12 = vsyncadd [#allocation3], %s11
      %s14 = sshll.u32 [#allocation2], 4
      %s15 = int_to_ptr.vmem [resolvable:$true] %s14
      %17 = dma.hbm_to_vmem [thread:$0]  %s0, 256, %s15, [#allocation3]
    $region5: #{tpu_custom_call.1} parent=1 // pred_fallthru
      _
    // Predicated region
    $region6: #{tpu_custom_call.1} parent=1 // pred_check
      _
    $region7: #{tpu_custom_call.1} parent=1 // pred_check_branch
      %19 = sbr.rel (0) target = $region9
    $region8: #{tpu_custom_call.1} parent=1 // pred_region
      %20 = dma.done [#allocation3], 256
    $region9: #{tpu_custom_call.1} parent=1 // pred_fallthru
      _
    %v21 = vld [vmem:[#allocation2] sm:$0xff]
    %v22 = vld [vmem:[#allocation2 + $0x8] sm:$0xff]
    %25 = vrot.lane.b32.xlu0 %v21, 96
    %v26 = vpop.permute.xlu0 %25
    %27 = vrot.lane.b32.xlu0 %v22, 96
    %v28 = vpop.permute.xlu0 %27
    %vm29 = vcmask 785408
    %v30 = vsel %vm29, %v26, %v28
    %vm33 = vcmask 1048320
    %34 = vst.msk [vmem:[#allocation5] sm:$0xff] %vm33, %v26
    %35 = vst [vmem:[#allocation5 + $0x8] sm:$0xff] %v30
    %v36 = vld [vmem:[#allocation2 + $0x8] sm:$0xff]
    %38 = vrot.lane.b32.xlu0 %v36, 96
    %v39 = vpop.permute.xlu0 %38
    %41 = vst.msk [vmem:[#allocation5] sm:$0xff] %vm29, %v39
    // Predicated region
    $region10: #{tpu_custom_call.1} parent=1 // pred_check
      _
    $region11: #{tpu_custom_call.1} parent=1 // pred_check_branch
      %43 = sbr.rel (0) target = $region13
    $region12: #{tpu_custom_call.1} parent=1 // pred_region
      %s45 = ssub.s32 256, 256
      %46 = vsyncadd [#allocation4], %s45
      %s48 = sshll.u32 [#allocation5], 4
      %s49 = int_to_ptr.vmem [resolvable:$true] %s48
      %51 = dma.vmem_to_hbm [thread:$0]  %s49, 256, %s1, [#allocation4]
    $region13: #{tpu_custom_call.1} parent=1 // pred_fallthru
      _
    // Predicated region
    $region14: #{tpu_custom_call.1} parent=1 // pred_check
      _
    $region15: #{tpu_custom_call.1} parent=1 // pred_check_branch
      %53 = sbr.rel (0) target = $region17
    $region16: #{tpu_custom_call.1} parent=1 // pred_region
      %54 = dma.done [#allocation4], 256
    $region17: #{tpu_custom_call.1} parent=1 // pred_fallthru
      _
    %55 = vsyncpa [#allocation3], 1
    %56 = vsyncpa [#allocation4], 1

</llo_original>
